<compile_context>
chip_gen: v7x
topology: tpu7x:2x2x1
jax: 0.10.0
libtpu: 0.0.40
codegen_flags: <defaults>
</compile_context>

<pallas_src>
import jax
import jax.numpy as jnp
from jax.experimental import pallas as pl
from jax.experimental.pallas import tpu as pltpu


# --------------------------------- clamp kernel ---------------------------------------
def clamp_kernel(x_ref, o_ref):
    v = x_ref[...]
    v = jnp.maximum(v, jnp.float32(0.2))    # clamp_min(0.2)
    v = jnp.minimum(v, jnp.float32(0.25))   # clamp_max(0.25)
    o_ref[...] = v.astype(o_ref.dtype)


def clamp_02_025(x_nchw):
    """clamp(x, 0.2, 0.25) on an NCHW tensor, done with a vreg-dense flat layout."""
    N, C, H, W = x_nchw.shape
    total = N * C * H * W

    if total % 128 == 0:
        # Lane-dense (last dim = 128) AND sublane-dense packing: 1536 -> (12, 128),
        # i.e. 2 vregs instead of 6 sublane-partial ones for the (2, 768) layout.
        flat_shape = (total // 128, 128)
    else:
        # Fallback: still correct, just not perfectly vreg-dense.
        flat_shape = (N, C * H * W)

    x_flat = x_nchw.reshape(flat_shape)

    out_flat = pl.pallas_call(
        clamp_kernel,
        out_shape=jax.ShapeDtypeStruct(flat_shape, x_nchw.dtype),
        in_specs=[pl.BlockSpec(memory_space=pltpu.MemorySpace.VMEM)],
        out_specs=pl.BlockSpec(memory_space=pltpu.MemorySpace.VMEM),
        input_output_aliases={0: 0},   # in-place: reuse the input HBM buffer
    )(x_flat)

    return out_flat.reshape(N, C, H, W)


# ------------------------------------ model -------------------------------------------
def model_forward(x):
    # TODO(synk): ConvTranspose2d(3->8, k=3, s=1, p=1) (v1) never reaches the module's
    # return value and has no side effects -> intentionally not computed (dead code).
    return clamp_02_025(x)


if __name__ == "__main__":
    key = jax.random.PRNGKey(0)

    # Small shapes consistent with the module: N=2, Cin=3 (conv in_channels), 16x16.
    N, Cin, H, W = 2, 3, 16, 16
    x = jax.random.normal(key, (N, Cin, H, W), dtype=jnp.float32)

    # Pure-JAX reference (computed before donating x).
    ref_out = jnp.minimum(jnp.maximum(x, 0.2), 0.25)

    fwd = jax.jit(model_forward, donate_argnums=0)
    out = fwd(x)
    jax.block_until_ready(out)

    assert out.shape == (N, Cin, H, W)
    assert jnp.allclose(out, ref_out, atol=1e-6), "clamp mismatch"

    print("KERNEL_OK")
</pallas_src>

<mosaic_0001>
module attributes {stable_mosaic.version = 11 : i64} {
  func.func @clamp_kernel(%arg0: memref<12x128xf32, #tpu.memory_space<vmem>>, %arg1: memref<12x128xf32, #tpu.memory_space<vmem>>) attributes {dimension_semantics = [], scalar_prefetch = 0 : i64, scratch_operands = 0 : i64, tpu.core_type = #tpu.core_type<tc>} {
    %c0 = arith.constant 0 : index
    %c0_0 = arith.constant 0 : index
    %0 = vector.load %arg0[%c0, %c0_0] : memref<12x128xf32, #tpu.memory_space<vmem>>, vector<12x128xf32>
    %cst = arith.constant 2.000000e-01 : f32
    %1 = vector.broadcast %cst : f32 to vector<12x128xf32>
    %2 = arith.maximumf %0, %1 : vector<12x128xf32>
    %cst_1 = arith.constant 2.500000e-01 : f32
    %3 = vector.broadcast %cst_1 : f32 to vector<12x128xf32>
    %4 = arith.minimumf %2, %3 : vector<12x128xf32>
    %c0_2 = arith.constant 0 : index
    %c0_3 = arith.constant 0 : index
    %5 = vector.load %arg1[%c0_2, %c0_3] : memref<12x128xf32, #tpu.memory_space<vmem>>, vector<12x128xf32>
    tpu.vector_store %arg1[%c0_2, %c0_3], %4 {strides = array<i32>} : memref<12x128xf32, #tpu.memory_space<vmem>>, vector<12x128xf32>,
    return
  }
}

</mosaic_0001>

<llo_original>
// kernel: model_forward.1
$region0: #{model_forward.1}
  #allocation0 [shape = 'u32[]', space=smem, size = 0x4, offset = 0x4, fixed_abs, tag = 'smem constant byte address 0x4 - core index']
  #allocation1 [shape = 'u32[144,128]{1,0:T(1,128)}', space=vmem, size = 0x12000, scoped, tag = 'internal scratch']
  %s0 = inlined_call_operand.vmem [shape: f32[12,128], index: 0, kind: input, shape index: {}, may-alias: {0,1}]
  %s1 = inlined_call_operand.vmem [shape: f32[12,128], index: 1, kind: output, shape index: {}, may-alias: {0,1}]
  %s2 = sld [smem:[#allocation0]]
  $region14: #{model_forward.1} parent=0
    _
  %s4 = ssub.s32 1, %s2
  %s5 = scalar_select 0, %s4, %s2
  // Predicated region
  $region2: #{model_forward.1} parent=0 // pred_check
    _
  $region3: #{model_forward.1} parent=0 // pred_check_branch
    %7 = sbr.rel (0) target = $region5
  $region4: #{model_forward.1} parent=0 // pred_region
    _
  $region5: #{model_forward.1} parent=0 // pred_fallthru
    _
  %v8 = vld [vmem:[%s0] sm:$0xff]
  %v9 = vld [vmem:[%s0 + $0x8] sm:$0xf]
  %v10 = vmax.f32 %v8, 0.2
  %v11 = vmax.f32 %v9, 0.2
  %v12 = vmin.f32 %v10, 0.25
  %v13 = vmin.f32 %v11, 0.25
  %14 = vst [vmem:[%s1] sm:$0xff] %v12
  %15 = vst [vmem:[%s1 + $0x8] sm:$0xf] %v13
  // Predicated region
  $region6: #{model_forward.1} parent=0 // pred_check
    _
  $region7: #{model_forward.1} parent=0 // pred_check_branch
    %17 = sbr.rel (0) target = $region9
  $region8: #{model_forward.1} parent=0 // pred_region
    _
  $region9: #{model_forward.1} parent=0 // pred_fallthru
    _
  // Predicated region
  $region10: #{model_forward.1} parent=0 // pred_check
    _
  $region11: #{model_forward.1} parent=0 // pred_check_branch
    %19 = sbr.rel (0) target = $region13
  $region12: #{model_forward.1} parent=0 // pred_region
    _
  $region13: #{model_forward.1} parent=0 // pred_fallthru
    _

</llo_original>
